<compile_context>
chip_gen: v6e
topology: v6e:2x2x1
jax: 0.10.0
libtpu: 0.0.40
codegen_flags: <defaults>
</compile_context>

<pallas_src>
import functools
from dataclasses import dataclass

import jax
import jax.numpy as jnp
from jax.experimental import pallas as pl
from jax.experimental.pallas import tpu as pltpu


@dataclass
class DetectionLossConfig:
    heatmap_loss_weight: float
    offset_loss_weight: float
    size_loss_weight: float
    heading_loss_weight: float
    heatmap_threshold: float
    heatmap_norm_scale: float


_LANE = 128
_MAX_ROWS_PER_STEP = 1024   # [Bb,7,1024,128] f32 ~= 3.6 MiB per operand per buffer
_NUM_PARTIALS = 5           # hm_sq, offset, size, heading, count
_ACC_ROWS = 8 * _NUM_PARTIALS


def _detection_loss_kernel(pred_ref, targ_ref, out_ref, *, heatmap_threshold,
                           hw, rows_per_step, steps_per_split):
    """Per-(batch-group, split, spatial-block) partial reductions.

    pred_ref / targ_ref : VMEM blocks [Bb, 7, S, 128] (native dtype, f32 upcast
                          in-kernel).
    out_ref             : VMEM block [1, 1, 40, 128] f32, revisited across the
                          spatial grid axis.  Five full (8,128) accumulator
                          tiles (rows 8c..8c+7):
        0: sum (target_hm - sigmoid(pred_hm))^2
        1: sum w * ||offset_err||_2
        2: sum w * ||size_err||_2
        3: sum w * ||heading_err||_2
        4: count(target_hm > threshold)
      with w = target_hm where (target_hm > threshold) else 0, and every
      element whose global flat index >= H*W masked out (pad / ragged tails /
      clamped overrun steps contribute exactly nothing).
    """
    p = pl.program_id(1)
    j = pl.program_id(2)

    @pl.when(j == 0)
    def _init():
        out_ref[...] = jnp.zeros_like(out_ref)

    f32 = jnp.float32
    S = rows_per_step

    # Validity mask for this step's (virtual) spatial window.
    sblock = p * steps_per_split + j
    row = jax.lax.broadcasted_iota(jnp.int32, (S, _LANE), 0)
    lane = jax.lax.broadcasted_iota(jnp.int32, (S, _LANE), 1)
    idx = (sblock * S + row) * _LANE + lane
    valid = idx < hw                       # [S,128]; broadcasts over the batch dim

    def pch(c):                            # predicted channel c -> [Bb, S, 128]
        return pred_ref[:, c].astype(f32)

    def tch(c):                            # target channel c
        return targ_ref[:, c].astype(f32)

    t_hm = tch(0)
    p_hm = jax.nn.sigmoid(pch(0))
    hm_sq = jnp.where(valid, (t_hm - p_hm) ** 2, 0.0)

    sel = valid & (t_hm > heatmap_threshold)
    cnt = sel.astype(f32)

    def weighted_l2(c0):
        d0 = tch(c0) - pch(c0)
        d1 = tch(c0 + 1) - pch(c0 + 1)
        # where-select (not multiply-by-mask) so garbage in masked-out ragged
        # rows can never leak a NaN/Inf into the sum.
        return jnp.where(sel, t_hm * jnp.sqrt(d0 * d0 + d1 * d1), 0.0)

    def accum(c, x):
        # Fold [Bb, S, 128] into the c-th full (8,128) accumulator tile using
        # plain vreg adds and an unmasked, tile-aligned store.
        xb = jnp.sum(x, axis=0)            # batch fold (element-wise vreg adds)
        if S % 8 == 0:
            acc = xb[0:8, :]
            for k in range(1, S // 8):     # tile-aligned value slices: free
                acc = acc + xb[8 * k:8 * (k + 1), :]
            out_ref[0, 0, 8 * c:8 * (c + 1), :] += acc
        else:
            # Tiny single-block feature maps only: fall back to a sublane reduce.
            out_ref[0, 0, 8 * c:8 * c + 1, :] += jnp.sum(xb, axis=0, keepdims=True)

    accum(0, hm_sq)
    accum(1, weighted_l2(1))   # offset
    accum(2, weighted_l2(3))   # size
    accum(3, weighted_l2(5))   # heading
    accum(4, cnt)


def detection_loss(predictions, targets, config: DetectionLossConfig, *,
                   max_rows_per_step: int = _MAX_ROWS_PER_STEP):
    """predictions, targets: [B, 7, H, W] (NCHW, like the torch module)."""
    B, C, H, W = predictions.shape
    assert C == 7 and targets.shape == predictions.shape
    HW = H * W

    max_rows = max(8, max_rows_per_step - max_rows_per_step % 8)

    T = pl.cdiv(HW, _LANE)                 # 128-lane rows covering H*W
    pad = T * _LANE - HW

    preds = predictions.reshape(B, C, HW)
    targs = targets.reshape(B, C, HW)
    if pad:
        # TODO(synk): for H*W % 128 != 0 this pad still costs one extra full
        # read+write of both tensors; removing it would require an in-kernel
        # [7, S*128] -> [7, S, 128] relayout that Mosaic does not do for free.
        # (The pad is a no-op whenever H*W is a multiple of 128; the padded
        # values are irrelevant because the kernel masks idx >= H*W anyway.)
        preds = jnp.pad(preds, ((0, 0), (0, 0), (0, pad)))
        targs = jnp.pad(targs, ((0, 0), (0, 0), (0, pad)))
    preds = preds.reshape(B, C, T, _LANE)
    targs = targs.reshape(B, C, T, _LANE)

    # Batch packing: for small feature maps move several batch elements per
    # grid step so each step still DMAs a sizeable block.
    Bb = 1
    if T < max_rows:
        cap = min(B, max(1, max_rows // T))
        for d in range(cap, 0, -1):
            if B % d == 0:
                Bb = d
                break
    G = B // Bb

    S = min(T, max_rows)                   # rows of 128 lanes per grid step
    n_sblocks = pl.cdiv(T, S)
    P = 2 if n_sblocks >= 2 else 1         # spatial split: keeps both v7x TCs busy
    J = pl.cdiv(n_sblocks, P)

    kernel = functools.partial(
        _detection_loss_kernel,
        heatmap_threshold=float(config.heatmap_threshold),
        hw=HW, rows_per_step=S, steps_per_split=J)

    def in_map(g, p, j):
        # Clamp overrun steps (P*J may exceed n_sblocks); their whole window is
        # masked out in-kernel, so revisiting the last real block is harmless.
        return (g, 0, jnp.minimum(p * J + j, n_sblocks - 1), 0)

    partials = pl.pallas_call(
        kernel,
        out_shape=jax.ShapeDtypeStruct((G, P, _ACC_ROWS, _LANE), jnp.float32),
        grid_spec=pltpu.PrefetchScalarGridSpec(
            num_scalar_prefetch=0,
            grid=(G, P, J),
            in_specs=[
                pl.BlockSpec((Bb, C, S, _LANE), in_map),
                pl.BlockSpec((Bb, C, S, _LANE), in_map),
            ],
            out_specs=pl.BlockSpec((1, 1, _ACC_ROWS, _LANE),
                                   lambda g, p, j: (g, p, 0, 0)),
        ),
        compiler_params=pltpu.CompilerParams(
            dimension_semantics=("parallel", "parallel", "arbitrary"),
            vmem_limit_bytes=32 * 1024 * 1024,
        ),
    )(preds, targs)

    sums = jnp.sum(partials.reshape(G, P, _NUM_PARTIALS, 8, _LANE),
                   axis=(0, 1, 3, 4))      # (5,) total partial sums

    heatmap_loss = sums[0] / float(B * H * W)     # mean over [B,1,H,W]
    count = sums[4]
    # NOTE: count == 0 gives 0/0 -> NaN, matching the torch reference behaviour.
    offset_loss = sums[1] / count
    size_loss = sums[2] / count
    heading_loss = sums[3] / count
    total_loss = (
        heatmap_loss * config.heatmap_loss_weight
        + offset_loss * config.offset_loss_weight
        + size_loss * config.size_loss_weight
        + heading_loss * config.heading_loss_weight
    )
    metadata = {
        "total_loss": total_loss,
        "heatmap_loss": heatmap_loss,
        "offset_loss": offset_loss,
        "size_loss": size_loss,
        "heading_loss": heading_loss,
    }
    return total_loss, metadata


def _reference_loss(predictions, targets, config: DetectionLossConfig):
    """Pure-JAX reference mirroring the torch forward (intended semantics)."""
    t_hm = targets[:, 0]
    p_hm = jax.nn.sigmoid(predictions[:, 0])
    heatmap_loss = jnp.mean((t_hm - p_hm) ** 2)
    mask = t_hm > config.heatmap_threshold

    def weighted(c0):
        d = targets[:, c0:c0 + 2] - predictions[:, c0:c0 + 2]
        l2 = jnp.sqrt(jnp.sum(d * d, axis=1))
        return jnp.sum(jnp.where(mask, t_hm * l2, 0.0)) / jnp.sum(mask)

    offset_loss = weighted(1)
    size_loss = weighted(3)
    heading_loss = weighted(5)
    total = (
        heatmap_loss * config.heatmap_loss_weight
        + offset_loss * config.offset_loss_weight
        + size_loss * config.size_loss_weight
        + heading_loss * config.heading_loss_weight
    )
    return total, (heatmap_loss, offset_loss, size_loss, heading_loss)


if __name__ == "__main__":
    config = DetectionLossConfig(
        heatmap_loss_weight=100.0,
        offset_loss_weight=10.0,
        size_loss_weight=1.0,
        heading_loss_weight=1.0,
        heatmap_threshold=0.4,
        heatmap_norm_scale=20.0,  # unused by forward
    )

    def make_inputs(key, B, H, W, dtype=jnp.float32):
        k_pred, k_targ, k_hm = jax.random.split(key, 3)
        predictions = jax.random.normal(k_pred, (B, 7, H, W), dtype=dtype)
        targets = jax.random.normal(k_targ, (B, 7, H, W), dtype=dtype)
        # Make the ground-truth heatmap channel look like a heatmap (in [0,1]).
        targets = targets.at[:, 0].set(jax.random.uniform(k_hm, (B, H, W), dtype=dtype))
        return predictions, targets

    # Primary small case (matches the module's expected usage).
    preds, targs = make_inputs(jax.random.PRNGKey(0), B=2, H=16, W=16)
    total, meta = detection_loss(preds, targs, config)
    total = jax.block_until_ready(total)

    ref_total, ref_parts = _reference_loss(preds, targs, config)
    assert jnp.allclose(total, ref_total, rtol=1e-5, atol=1e-5), (total, ref_total)
    for name, ref in zip(("heatmap_loss", "offset_loss", "size_loss", "heading_loss"),
                         ref_parts):
        assert jnp.allclose(meta[name], ref, rtol=1e-5, atol=1e-6), (name, meta[name], ref)

    # Extra (still small) coverage: the S%8==0 fold path, the ragged H*W
    # (pad + in-kernel mask) path, and the multi-step / dual-split / clamped
    # overrun path.
    extra_cases = [
        dict(B=2, H=32, W=32, max_rows=_MAX_ROWS_PER_STEP),  # S % 8 == 0 fold
        dict(B=1, H=12, W=11, max_rows=_MAX_ROWS_PER_STEP),  # H*W % 128 != 0
        dict(B=1, H=40, W=128, max_rows=16),                 # 3 blocks, P=2 + clamp
    ]
    for i, case in enumerate(extra_cases):
        preds_i, targs_i = make_inputs(jax.random.PRNGKey(i + 1),
                                       case["B"], case["H"], case["W"])
        tot_i, _ = detection_loss(preds_i, targs_i, config,
                                  max_rows_per_step=case["max_rows"])
        tot_i = jax.block_until_ready(tot_i)
        ref_tot_i, _ = _reference_loss(preds_i, targs_i, config)
        assert jnp.allclose(tot_i, ref_tot_i, rtol=1e-5, atol=1e-5), (case, tot_i, ref_tot_i)

    print("KERNEL_OK")
</pallas_src>

<mosaic_0001>
module attributes {stable_mosaic.version = 11 : i64} {
  func.func @_detection_loss_kernel(%arg0: i32, %arg1: i32, %arg2: i32, %arg3: memref<2x7x2x128xf32, #tpu.memory_space<vmem>>, %arg4: memref<2x7x2x128xf32, #tpu.memory_space<vmem>>, %arg5: memref<1x1x40x128xf32, #tpu.memory_space<vmem>>) attributes {dimension_semantics = [#tpu.dimension_semantics<parallel>, #tpu.dimension_semantics<parallel>, #tpu.dimension_semantics<arbitrary>], iteration_bounds = array<i64: 1, 1, 1>, scalar_prefetch = 0 : i64, scratch_operands = 0 : i64, tpu.core_type = #tpu.core_type<tc>, window_params = [{transform_indices = @transform_0, window_bounds = array<i64: 2, 7, 2, 128>}, {transform_indices = @transform_1, window_bounds = array<i64: 2, 7, 2, 128>}, {transform_indices = @transform_2, window_bounds = array<i64: 1, 1, 40, 128>}]} {
    %c0_i32 = arith.constant 0 : i32
    %0 = arith.cmpi eq, %arg2, %c0_i32 : i32
    %1 = arith.extui %0 : i1 to i32
    %c0_i32_0 = arith.constant 0 : i32
    %2 = arith.cmpi ne, %1, %c0_i32_0 : i32
    scf.if %2 {
      %cst_101 = arith.constant 0.000000e+00 : f32
      %133 = vector.broadcast %cst_101 : f32 to vector<1x1x40x128xf32>
      %c0_102 = arith.constant 0 : index
      %c0_103 = arith.constant 0 : index
      %c0_104 = arith.constant 0 : index
      %c0_105 = arith.constant 0 : index
      %134 = vector.load %arg5[%c0_102, %c0_103, %c0_104, %c0_105] : memref<1x1x40x128xf32, #tpu.memory_space<vmem>>, vector<1x1x40x128xf32>
      tpu.vector_store %arg5[%c0_102, %c0_103, %c0_104, %c0_105], %133 {strides = array<i32>} : memref<1x1x40x128xf32, #tpu.memory_space<vmem>>, vector<1x1x40x128xf32>,
    } else {
    }
    %c1_i32 = arith.constant 1 : i32
    %3 = arith.muli %arg1, %c1_i32 : i32
    %4 = arith.addi %3, %arg2 : i32
    %5 = tpu.iota {dimensions = array<i32: 0>} : vector<2x128xi32>
    %6 = tpu.iota {dimensions = array<i32: 1>} : vector<2x128xi32>
    %c2_i32 = arith.constant 2 : i32
    %7 = arith.muli %4, %c2_i32 : i32
    %8 = vector.broadcast %7 : i32 to vector<2x128xi32>
    %9 = arith.addi %8, %5 : vector<2x128xi32>
    %c128_i32 = arith.constant 128 : i32
    %10 = vector.broadcast %c128_i32 : i32 to vector<2x128xi32>
    %11 = arith.muli %9, %10 : vector<2x128xi32>
    %12 = arith.addi %11, %6 : vector<2x128xi32>
    %c256_i32 = arith.constant 256 : i32
    %13 = vector.broadcast %c256_i32 : i32 to vector<2x128xi32>
    %14 = arith.cmpi slt, %12, %13 : vector<2x128xi32>
    %c0 = arith.constant 0 : index
    %c0_1 = arith.constant 0 : index
    %c0_2 = arith.constant 0 : index
    %c0_3 = arith.constant 0 : index
    %15 = vector.load %arg4[%c0, %c0_1, %c0_2, %c0_3] : memref<2x7x2x128xf32, #tpu.memory_space<vmem>>, vector<2x1x2x128xf32>
    %16 = vector.shape_cast %15 : vector<2x1x2x128xf32> to vector<2x2x128xf32>
    %c0_4 = arith.constant 0 : index
    %c0_5 = arith.constant 0 : index
    %c0_6 = arith.constant 0 : index
    %c0_7 = arith.constant 0 : index
    %17 = vector.load %arg3[%c0_4, %c0_5, %c0_6, %c0_7] : memref<2x7x2x128xf32, #tpu.memory_space<vmem>>, vector<2x1x2x128xf32>
    %18 = vector.shape_cast %17 : vector<2x1x2x128xf32> to vector<2x2x128xf32>
    %19 = arith.negf %18 : vector<2x2x128xf32>
    %20 = math.exp %19 : vector<2x2x128xf32>
    %cst = arith.constant 1.000000e+00 : f32
    %21 = vector.broadcast %cst : f32 to vector<2x2x128xf32>
    %22 = arith.addf %21, %20 : vector<2x2x128xf32>
    %23 = arith.divf %21, %22 : vector<2x2x128xf32>
    %24 = arith.subf %16, %23 : vector<2x2x128xf32>
    %25 = arith.mulf %24, %24 : vector<2x2x128xf32>
    %cst_8 = arith.constant 0.000000e+00 : f32
    %26 = vector.shape_cast %14 : vector<2x128xi1> to vector<1x2x128xi1>
    %27 = vector.broadcast %26 : vector<1x2x128xi1> to vector<2x2x128xi1>
    %28 = vector.broadcast %cst_8 : f32 to vector<2x2x128xf32>
    %29 = arith.select %27, %25, %28 : vector<2x2x128xi1>, vector<2x2x128xf32>
    %cst_9 = arith.constant 4.000000e-01 : f32
    %30 = vector.broadcast %cst_9 : f32 to vector<2x2x128xf32>
    %31 = arith.cmpf ogt, %16, %30 : vector<2x2x128xf32>
    %32 = vector.shape_cast %14 : vector<2x128xi1> to vector<1x2x128xi1>
    %33 = vector.broadcast %32 : vector<1x2x128xi1> to vector<2x2x128xi1>
    %34 = arith.andi %33, %31 : vector<2x2x128xi1>
    %35 = arith.extui %34 : vector<2x2x128xi1> to vector<2x2x128xi32>
    %36 = arith.sitofp %35 : vector<2x2x128xi32> to vector<2x2x128xf32>
    %cst_10 = arith.constant dense<0.000000e+00> : vector<2x128xf32>
    %37 = vector.multi_reduction <add>, %29, %cst_10 [0] : vector<2x2x128xf32> to vector<2x128xf32>
    %c0_11 = arith.constant 0 : index
    %c0_12 = arith.constant 0 : index
    %c0_13 = arith.constant 0 : index
    %c0_14 = arith.constant 0 : index
    %38 = vector.load %arg5[%c0_11, %c0_12, %c0_13, %c0_14] : memref<1x1x40x128xf32, #tpu.memory_space<vmem>>, vector<1x1x1x128xf32>
    %39 = vector.shape_cast %38 : vector<1x1x1x128xf32> to vector<1x128xf32>
    %cst_15 = arith.constant dense<0.000000e+00> : vector<128xf32>
    %40 = vector.multi_reduction <add>, %37, %cst_15 [0] : vector<2x128xf32> to vector<128xf32>
    %41 = vector.shape_cast %40 : vector<128xf32> to vector<1x128xf32>
    %42 = arith.addf %39, %41 : vector<1x128xf32>
    %c0_16 = arith.constant 0 : index
    %c0_17 = arith.constant 0 : index
    %c0_18 = arith.constant 0 : index
    %c0_19 = arith.constant 0 : index
    %43 = vector.load %arg5[%c0_16, %c0_17, %c0_18, %c0_19] : memref<1x1x40x128xf32, #tpu.memory_space<vmem>>, vector<1x1x1x128xf32>
    %44 = vector.shape_cast %43 : vector<1x1x1x128xf32> to vector<1x128xf32>
    %45 = vector.shape_cast %42 : vector<1x128xf32> to vector<1x1x1x128xf32>
    tpu.vector_store %arg5[%c0_16, %c0_17, %c0_18, %c0_19], %45 {strides = array<i32>} : memref<1x1x40x128xf32, #tpu.memory_space<vmem>>, vector<1x1x1x128xf32>,
    %c0_20 = arith.constant 0 : index
    %c1 = arith.constant 1 : index
    %c0_21 = arith.constant 0 : index
    %c0_22 = arith.constant 0 : index
    %46 = vector.load %arg4[%c0_20, %c1, %c0_21, %c0_22] : memref<2x7x2x128xf32, #tpu.memory_space<vmem>>, vector<2x1x2x128xf32>
    %47 = vector.shape_cast %46 : vector<2x1x2x128xf32> to vector<2x2x128xf32>
    %c0_23 = arith.constant 0 : index
    %c1_24 = arith.constant 1 : index
    %c0_25 = arith.constant 0 : index
    %c0_26 = arith.constant 0 : index
    %48 = vector.load %arg3[%c0_23, %c1_24, %c0_25, %c0_26] : memref<2x7x2x128xf32, #tpu.memory_space<vmem>>, vector<2x1x2x128xf32>
    %49 = vector.shape_cast %48 : vector<2x1x2x128xf32> to vector<2x2x128xf32>
    %50 = arith.subf %47, %49 : vector<2x2x128xf32>
    %c0_27 = arith.constant 0 : index
    %c2 = arith.constant 2 : index
    %c0_28 = arith.constant 0 : index
    %c0_29 = arith.constant 0 : index
    %51 = vector.load %arg4[%c0_27, %c2, %c0_28, %c0_29] : memref<2x7x2x128xf32, #tpu.memory_space<vmem>>, vector<2x1x2x128xf32>
    %52 = vector.shape_cast %51 : vector<2x1x2x128xf32> to vector<2x2x128xf32>
    %c0_30 = arith.constant 0 : index
    %c2_31 = arith.constant 2 : index
    %c0_32 = arith.constant 0 : index
    %c0_33 = arith.constant 0 : index
    %53 = vector.load %arg3[%c0_30, %c2_31, %c0_32, %c0_33] : memref<2x7x2x128xf32, #tpu.memory_space<vmem>>, vector<2x1x2x128xf32>
    %54 = vector.shape_cast %53 : vector<2x1x2x128xf32> to vector<2x2x128xf32>
    %55 = arith.subf %52, %54 : vector<2x2x128xf32>
    %56 = arith.mulf %50, %50 : vector<2x2x128xf32>
    %57 = arith.mulf %55, %55 : vector<2x2x128xf32>
    %58 = arith.addf %56, %57 : vector<2x2x128xf32>
    %59 = math.sqrt %58 : vector<2x2x128xf32>
    %60 = arith.mulf %16, %59 : vector<2x2x128xf32>
    %cst_34 = arith.constant 0.000000e+00 : f32
    %61 = vector.broadcast %cst_34 : f32 to vector<2x2x128xf32>
    %62 = arith.select %34, %60, %61 : vector<2x2x128xi1>, vector<2x2x128xf32>
    %cst_35 = arith.constant dense<0.000000e+00> : vector<2x128xf32>
    %63 = vector.multi_reduction <add>, %62, %cst_35 [0] : vector<2x2x128xf32> to vector<2x128xf32>
    %c0_36 = arith.constant 0 : index
    %c0_37 = arith.constant 0 : index
    %c8 = arith.constant 8 : index
    %c0_38 = arith.constant 0 : index
    %64 = vector.load %arg5[%c0_36, %c0_37, %c8, %c0_38] : memref<1x1x40x128xf32, #tpu.memory_space<vmem>>, vector<1x1x1x128xf32>
    %65 = vector.shape_cast %64 : vector<1x1x1x128xf32> to vector<1x128xf32>
    %cst_39 = arith.constant dense<0.000000e+00> : vector<128xf32>
    %66 = vector.multi_reduction <add>, %63, %cst_39 [0] : vector<2x128xf32> to vector<128xf32>
    %67 = vector.shape_cast %66 : vector<128xf32> to vector<1x128xf32>
    %68 = arith.addf %65, %67 : vector<1x128xf32>
    %c0_40 = arith.constant 0 : index
    %c0_41 = arith.constant 0 : index
    %c8_42 = arith.constant 8 : index
    %c0_43 = arith.constant 0 : index
    %69 = vector.load %arg5[%c0_40, %c0_41, %c8_42, %c0_43] : memref<1x1x40x128xf32, #tpu.memory_space<vmem>>, vector<1x1x1x128xf32>
    %70 = vector.shape_cast %69 : vector<1x1x1x128xf32> to vector<1x128xf32>
    %71 = vector.shape_cast %68 : vector<1x128xf32> to vector<1x1x1x128xf32>
    tpu.vector_store %arg5[%c0_40, %c0_41, %c8_42, %c0_43], %71 {strides = array<i32>} : memref<1x1x40x128xf32, #tpu.memory_space<vmem>>, vector<1x1x1x128xf32>,
    %c0_44 = arith.constant 0 : index
    %c3 = arith.constant 3 : index
    %c0_45 = arith.constant 0 : index
    %c0_46 = arith.constant 0 : index
    %72 = vector.load %arg4[%c0_44, %c3, %c0_45, %c0_46] : memref<2x7x2x128xf32, #tpu.memory_space<vmem>>, vector<2x1x2x128xf32>
    %73 = vector.shape_cast %72 : vector<2x1x2x128xf32> to vector<2x2x128xf32>
    %c0_47 = arith.constant 0 : index
    %c3_48 = arith.constant 3 : index
    %c0_49 = arith.constant 0 : index
    %c0_50 = arith.constant 0 : index
    %74 = vector.load %arg3[%c0_47, %c3_48, %c0_49, %c0_50] : memref<2x7x2x128xf32, #tpu.memory_space<vmem>>, vector<2x1x2x128xf32>
    %75 = vector.shape_cast %74 : vector<2x1x2x128xf32> to vector<2x2x128xf32>
    %76 = arith.subf %73, %75 : vector<2x2x128xf32>
    %c0_51 = arith.constant 0 : index
    %c4 = arith.constant 4 : index
    %c0_52 = arith.constant 0 : index
    %c0_53 = arith.constant 0 : index
    %77 = vector.load %arg4[%c0_51, %c4, %c0_52, %c0_53] : memref<2x7x2x128xf32, #tpu.memory_space<vmem>>, vector<2x1x2x128xf32>
    %78 = vector.shape_cast %77 : vector<2x1x2x128xf32> to vector<2x2x128xf32>
    %c0_54 = arith.constant 0 : index
    %c4_55 = arith.constant 4 : index
    %c0_56 = arith.constant 0 : index
    %c0_57 = arith.constant 0 : index
    %79 = vector.load %arg3[%c0_54, %c4_55, %c0_56, %c0_57] : memref<2x7x2x128xf32, #tpu.memory_space<vmem>>, vector<2x1x2x128xf32>
    %80 = vector.shape_cast %79 : vector<2x1x2x128xf32> to vector<2x2x128xf32>
    %81 = arith.subf %78, %80 : vector<2x2x128xf32>
    %82 = arith.mulf %76, %76 : vector<2x2x128xf32>
    %83 = arith.mulf %81, %81 : vector<2x2x128xf32>
    %84 = arith.addf %82, %83 : vector<2x2x128xf32>
    %85 = math.sqrt %84 : vector<2x2x128xf32>
    %86 = arith.mulf %16, %85 : vector<2x2x128xf32>
    %cst_58 = arith.constant 0.000000e+00 : f32
    %87 = vector.broadcast %cst_58 : f32 to vector<2x2x128xf32>
    %88 = arith.select %34, %86, %87 : vector<2x2x128xi1>, vector<2x2x128xf32>
    %cst_59 = arith.constant dense<0.000000e+00> : vector<2x128xf32>
    %89 = vector.multi_reduction <add>, %88, %cst_59 [0] : vector<2x2x128xf32> to vector<2x128xf32>
    %c0_60 = arith.constant 0 : index
    %c0_61 = arith.constant 0 : index
    %c16 = arith.constant 16 : index
    %c0_62 = arith.constant 0 : index
    %90 = vector.load %arg5[%c0_60, %c0_61, %c16, %c0_62] : memref<1x1x40x128xf32, #tpu.memory_space<vmem>>, vector<1x1x1x128xf32>
    %91 = vector.shape_cast %90 : vector<1x1x1x128xf32> to vector<1x128xf32>
    %cst_63 = arith.constant dense<0.000000e+00> : vector<128xf32>
    %92 = vector.multi_reduction <add>, %89, %cst_63 [0] : vector<2x128xf32> to vector<128xf32>
    %93 = vector.shape_cast %92 : vector<128xf32> to vector<1x128xf32>
    %94 = arith.addf %91, %93 : vector<1x128xf32>
    %c0_64 = arith.constant 0 : index
    %c0_65 = arith.constant 0 : index
    %c16_66 = arith.constant 16 : index
    %c0_67 = arith.constant 0 : index
    %95 = vector.load %arg5[%c0_64, %c0_65, %c16_66, %c0_67] : memref<1x1x40x128xf32, #tpu.memory_space<vmem>>, vector<1x1x1x128xf32>
    %96 = vector.shape_cast %95 : vector<1x1x1x128xf32> to vector<1x128xf32>
    %97 = vector.shape_cast %94 : vector<1x128xf32> to vector<1x1x1x128xf32>
    tpu.vector_store %arg5[%c0_64, %c0_65, %c16_66, %c0_67], %97 {strides = array<i32>} : memref<1x1x40x128xf32, #tpu.memory_space<vmem>>, vector<1x1x1x128xf32>,
    %c0_68 = arith.constant 0 : index
    %c5 = arith.constant 5 : index
    %c0_69 = arith.constant 0 : index
    %c0_70 = arith.constant 0 : index
    %98 = vector.load %arg4[%c0_68, %c5, %c0_69, %c0_70] : memref<2x7x2x128xf32, #tpu.memory_space<vmem>>, vector<2x1x2x128xf32>
    %99 = vector.shape_cast %98 : vector<2x1x2x128xf32> to vector<2x2x128xf32>
    %c0_71 = arith.constant 0 : index
    %c5_72 = arith.constant 5 : index
    %c0_73 = arith.constant 0 : index
    %c0_74 = arith.constant 0 : index
    %100 = vector.load %arg3[%c0_71, %c5_72, %c0_73, %c0_74] : memref<2x7x2x128xf32, #tpu.memory_space<vmem>>, vector<2x1x2x128xf32>
    %101 = vector.shape_cast %100 : vector<2x1x2x128xf32> to vector<2x2x128xf32>
    %102 = arith.subf %99, %101 : vector<2x2x128xf32>
    %c0_75 = arith.constant 0 : index
    %c6 = arith.constant 6 : index
    %c0_76 = arith.constant 0 : index
    %c0_77 = arith.constant 0 : index
    %103 = vector.load %arg4[%c0_75, %c6, %c0_76, %c0_77] : memref<2x7x2x128xf32, #tpu.memory_space<vmem>>, vector<2x1x2x128xf32>
    %104 = vector.shape_cast %103 : vector<2x1x2x128xf32> to vector<2x2x128xf32>
    %c0_78 = arith.constant 0 : index
    %c6_79 = arith.constant 6 : index
    %c0_80 = arith.constant 0 : index
    %c0_81 = arith.constant 0 : index
    %105 = vector.load %arg3[%c0_78, %c6_79, %c0_80, %c0_81] : memref<2x7x2x128xf32, #tpu.memory_space<vmem>>, vector<2x1x2x128xf32>
    %106 = vector.shape_cast %105 : vector<2x1x2x128xf32> to vector<2x2x128xf32>
    %107 = arith.subf %104, %106 : vector<2x2x128xf32>
    %108 = arith.mulf %102, %102 : vector<2x2x128xf32>
    %109 = arith.mulf %107, %107 : vector<2x2x128xf32>
    %110 = arith.addf %108, %109 : vector<2x2x128xf32>
    %111 = math.sqrt %110 : vector<2x2x128xf32>
    %112 = arith.mulf %16, %111 : vector<2x2x128xf32>
    %cst_82 = arith.constant 0.000000e+00 : f32
    %113 = vector.broadcast %cst_82 : f32 to vector<2x2x128xf32>
    %114 = arith.select %34, %112, %113 : vector<2x2x128xi1>, vector<2x2x128xf32>
    %cst_83 = arith.constant dense<0.000000e+00> : vector<2x128xf32>
    %115 = vector.multi_reduction <add>, %114, %cst_83 [0] : vector<2x2x128xf32> to vector<2x128xf32>
    %c0_84 = arith.constant 0 : index
    %c0_85 = arith.constant 0 : index
    %c24 = arith.constant 24 : index
    %c0_86 = arith.constant 0 : index
    %116 = vector.load %arg5[%c0_84, %c0_85, %c24, %c0_86] : memref<1x1x40x128xf32, #tpu.memory_space<vmem>>, vector<1x1x1x128xf32>
    %117 = vector.shape_cast %116 : vector<1x1x1x128xf32> to vector<1x128xf32>
    %cst_87 = arith.constant dense<0.000000e+00> : vector<128xf32>
    %118 = vector.multi_reduction <add>, %115, %cst_87 [0] : vector<2x128xf32> to vector<128xf32>
    %119 = vector.shape_cast %118 : vector<128xf32> to vector<1x128xf32>
    %120 = arith.addf %117, %119 : vector<1x128xf32>
    %c0_88 = arith.constant 0 : index
    %c0_89 = arith.constant 0 : index
    %c24_90 = arith.constant 24 : index
    %c0_91 = arith.constant 0 : index
    %121 = vector.load %arg5[%c0_88, %c0_89, %c24_90, %c0_91] : memref<1x1x40x128xf32, #tpu.memory_space<vmem>>, vector<1x1x1x128xf32>
    %122 = vector.shape_cast %121 : vector<1x1x1x128xf32> to vector<1x128xf32>
    %123 = vector.shape_cast %120 : vector<1x128xf32> to vector<1x1x1x128xf32>
    tpu.vector_store %arg5[%c0_88, %c0_89, %c24_90, %c0_91], %123 {strides = array<i32>} : memref<1x1x40x128xf32, #tpu.memory_space<vmem>>, vector<1x1x1x128xf32>,
    %cst_92 = arith.constant dense<0.000000e+00> : vector<2x128xf32>
    %124 = vector.multi_reduction <add>, %36, %cst_92 [0] : vector<2x2x128xf32> to vector<2x128xf32>
    %c0_93 = arith.constant 0 : index
    %c0_94 = arith.constant 0 : index
    %c32 = arith.constant 32 : index
    %c0_95 = arith.constant 0 : index
    %125 = vector.load %arg5[%c0_93, %c0_94, %c32, %c0_95] : memref<1x1x40x128xf32, #tpu.memory_space<vmem>>, vector<1x1x1x128xf32>
    %126 = vector.shape_cast %125 : vector<1x1x1x128xf32> to vector<1x128xf32>
    %cst_96 = arith.constant dense<0.000000e+00> : vector<128xf32>
    %127 = vector.multi_reduction <add>, %124, %cst_96 [0] : vector<2x128xf32> to vector<128xf32>
    %128 = vector.shape_cast %127 : vector<128xf32> to vector<1x128xf32>
    %129 = arith.addf %126, %128 : vector<1x128xf32>
    %c0_97 = arith.constant 0 : index
    %c0_98 = arith.constant 0 : index
    %c32_99 = arith.constant 32 : index
    %c0_100 = arith.constant 0 : index
    %130 = vector.load %arg5[%c0_97, %c0_98, %c32_99, %c0_100] : memref<1x1x40x128xf32, #tpu.memory_space<vmem>>, vector<1x1x1x128xf32>
    %131 = vector.shape_cast %130 : vector<1x1x1x128xf32> to vector<1x128xf32>
    %132 = vector.shape_cast %129 : vector<1x128xf32> to vector<1x1x1x128xf32>
    tpu.vector_store %arg5[%c0_97, %c0_98, %c32_99, %c0_100], %132 {strides = array<i32>} : memref<1x1x40x128xf32, #tpu.memory_space<vmem>>, vector<1x1x1x128xf32>,
    return
  }
  func.func @transform_0(%arg0: i32, %arg1: i32, %arg2: i32) -> (i32, i32, i32, i32) {
    %c1_i32 = arith.constant 1 : i32
    %0 = arith.muli %arg1, %c1_i32 : i32
    %1 = arith.addi %0, %arg2 : i32
    %c0_i32 = arith.constant 0 : i32
    %2 = arith.minsi %1, %c0_i32 : i32
    %c0_i32_0 = arith.constant 0 : i32
    %c0_i32_1 = arith.constant 0 : i32
    %c0_i32_2 = arith.constant 0 : i32
    return %arg0, %c0_i32_0, %2, %c0_i32_1 : i32, i32, i32, i32
  }
  func.func @transform_1(%arg0: i32, %arg1: i32, %arg2: i32) -> (i32, i32, i32, i32) {
    %c1_i32 = arith.constant 1 : i32
    %0 = arith.muli %arg1, %c1_i32 : i32
    %1 = arith.addi %0, %arg2 : i32
    %c0_i32 = arith.constant 0 : i32
    %2 = arith.minsi %1, %c0_i32 : i32
    %c0_i32_0 = arith.constant 0 : i32
    %c0_i32_1 = arith.constant 0 : i32
    %c0_i32_2 = arith.constant 0 : i32
    return %arg0, %c0_i32_0, %2, %c0_i32_1 : i32, i32, i32, i32
  }
  func.func @transform_2(%arg0: i32, %arg1: i32, %arg2: i32) -> (i32, i32, i32, i32) {
    %c0_i32 = arith.constant 0 : i32
    %c0_i32_0 = arith.constant 0 : i32
    %c0_i32_1 = arith.constant 0 : i32
    return %arg0, %arg1, %c0_i32, %c0_i32_0 : i32, i32, i32, i32
  }
}

</mosaic_0001>

<llo_original>
// kernel: tpu_custom_call.1
$region0: #{tpu_custom_call.1}
  #allocation0 [shape = 'u32[]', space=smem, size = 0x4, offset = 0x4, fixed_abs, tag = 'smem constant byte address 0x4 - core index']
  #allocation1 [shape = 'u32[144,128]{1,0:T(1,128)}', space=vmem, size = 0x12000, scoped, tag = 'internal scratch']
  %s0 = inlined_call_operand.hbm [shape: f32[2,7,2,128], index: 0, kind: input, shape index: {}]
  %s1 = inlined_call_operand.hbm [shape: f32[2,7,2,128], index: 1, kind: input, shape index: {}]
  %s2 = inlined_call_operand.hbm [shape: f32[1,1,40,128], index: 2, kind: output, shape index: {}]
  %s3 = sld [smem:[#allocation0]]
  $region30: #{tpu_custom_call.1} parent=0
    _
  %s5 = ssub.s32 1, %s3
  %s6 = scalar_select 0, %s5, %s3
  $region1: #{tpu_custom_call.1} parent=0
    #allocation2 [shape = 'u8[14336]{0}', space=vmem, size = 0x3800, scoped, tag = 'input window, operand 0, single buffered']
    #allocation3 [shape = 's32[1]{0}', space=sflag, size = 0x4, scoped, tag = 'scoped memory for tpu_custom_call.1']
    #allocation4 [shape = 's32[1]{0}', space=sflag, size = 0x4, scoped, tag = 'scoped memory for tpu_custom_call.1']
    #allocation5 [shape = 'u8[14336]{0}', space=vmem, size = 0x3800, scoped, tag = 'input window, operand 1, single buffered']
    #allocation6 [shape = 's32[1]{0}', space=sflag, size = 0x4, scoped, tag = 'scoped memory for tpu_custom_call.1']
    #allocation7 [shape = 'u8[20480]{0}', space=vmem, size = 0x5000, scoped, tag = 'output window, operand 0, single buffered']
    %7 = vsyncpa [#allocation3], 0
    %8 = vsyncpa [#allocation6], 0
    %9 = vsyncpa [#allocation4], 0
    // Predicated region
    $region2: #{tpu_custom_call.1} parent=1 // pred_check
      _
    $region3: #{tpu_custom_call.1} parent=1 // pred_check_branch
      %11 = sbr.rel (0) target = $region5
    $region4: #{tpu_custom_call.1} parent=1 // pred_region
      %s12 = sadd.s32 0, 0
      %p13 = scmp.lt.s32.totalorder %s12, 0
      %s14 = scalar_select %p13, %s12, 0
      %s16 = ssub.s32 448, 448
      %17 = vsyncadd [#allocation3], %s16
      %s18 = smul.addr %s14, 32
      %s19 = scalar_lea.hbm %s0, %s18
      %s20 = sshll.u32 [#allocation2], 4
      %s21 = int_to_ptr.vmem [resolvable:$true] %s20
      %26 = dma.hbm_to_vmem [thread:$0]  %s19, 448, %s21, [#allocation3], 32, 32, 2
    $region5: #{tpu_custom_call.1} parent=1 // pred_fallthru
      _
    // Predicated region
    $region6: #{tpu_custom_call.1} parent=1 // pred_check
      _
    $region7: #{tpu_custom_call.1} parent=1 // pred_check_branch
      %28 = sbr.rel (0) target = $region9
    $region8: #{tpu_custom_call.1} parent=1 // pred_region
      %s29 = sadd.s32 0, 0
      %p30 = scmp.lt.s32.totalorder %s29, 0
      %s31 = scalar_select %p30, %s29, 0
      %s33 = ssub.s32 448, 448
      %34 = vsyncadd [#allocation6], %s33
      %s35 = smul.addr %s31, 32
      %s36 = scalar_lea.hbm %s1, %s35
      %s37 = sshll.u32 [#allocation5], 4
      %s38 = int_to_ptr.vmem [resolvable:$true] %s37
      %43 = dma.hbm_to_vmem [thread:$0]  %s36, 448, %s38, [#allocation6], 32, 32, 2
    $region9: #{tpu_custom_call.1} parent=1 // pred_fallthru
      _
    // Predicated region
    $region10: #{tpu_custom_call.1} parent=1 // pred_check
      _
    $region11: #{tpu_custom_call.1} parent=1 // pred_check_branch
      %45 = sbr.rel (0) target = $region13
    $region12: #{tpu_custom_call.1} parent=1 // pred_region
      %46 = dma.done [#allocation3], 448
    $region13: #{tpu_custom_call.1} parent=1 // pred_fallthru
      _
    // Predicated region
    $region14: #{tpu_custom_call.1} parent=1 // pred_check
      _
    $region15: #{tpu_custom_call.1} parent=1 // pred_check_branch
      %48 = sbr.rel (0) target = $region17
    $region16: #{tpu_custom_call.1} parent=1 // pred_region
      %49 = dma.done [#allocation6], 448
    $region17: #{tpu_custom_call.1} parent=1 // pred_fallthru
      _
    %s50 = sadd.s32 0, 0
    %p51 = scmp.lt.s32.totalorder %s50, 0
    %s52 = scalar_select %p51, %s50, 0
    %s53 = sadd.s32 0, 0
    %p54 = scmp.lt.s32.totalorder %s53, 0
    %s55 = scalar_select %p54, %s53, 0
    %p56 = scmp.eq.s32.totalorder 0, 0
    // Predicated region
    $region18: #{tpu_custom_call.1} parent=1 // pred_check
      %p57 = pneg %p56
    $region19: #{tpu_custom_call.1} parent=1 // pred_check_branch
      %59 = sbr.rel (%p57) target = $region21
    $region20: #{tpu_custom_call.1} parent=1 // pred_region
      %60 = vst [vmem:[#allocation7] sm:$0xff] 0.0
      %61 = vst [vmem:[#allocation7 + $0x8] sm:$0xff] 0.0
      %62 = vst [vmem:[#allocation7 + $0x10] sm:$0xff] 0.0
      %63 = vst [vmem:[#allocation7 + $0x18] sm:$0xff] 0.0
      %64 = vst [vmem:[#allocation7 + $0x20] sm:$0xff] 0.0
    $region21: #{tpu_custom_call.1} parent=1 // pred_fallthru
      _
    %s65 = sadd.s32 0, 0
    %v66 = vlaneseq
    %v67 = vshrl.u32 %v66, 7
    %v68 = vlaneseq
    %v69 = vand.u32 %v68, 127
    %s70 = smul.u32 %s65, 2
    %v71 = vstv %s70
    %v72 = vadd.s32 %v71, %v67
    %v73 = vmul.u32 %v72, 128
    %v74 = vadd.s32 %v73, %v69
    %vm75 = vcmp.lt.s32.totalorder %v74, 256
    %v76 = vld [vmem:[#allocation5] sm:$0x3]
    %v77 = vld [vmem:[#allocation5 + $0xe] sm:$0x3]
    %v78 = vld [vmem:[#allocation2] sm:$0x3]
    %v79 = vld [vmem:[#allocation2 + $0xe] sm:$0x3]
    %v80 = vxor.u32 %v78, 2147483648
    %v81 = vxor.u32 %v79, 2147483648
    %v82 = vmul.f32 %v80, 1.442695
    %v83 = vpow.pop %v82
    %v84 = vmul.f32 %v81, 1.442695
    %v85 = vpow.pop %v84
    %v86 = vadd.f32 %v83, 1.0
    %v87 = vadd.f32 %v85, 1.0
    %v88 = vrcp.pop %v86
    %v89 = vmul.f32 1.0, %v88
    %v90 = vrcp.pop %v87
    %v91 = vmul.f32 1.0, %v90
    %v92 = vsub.f32 %v76, %v89
    %v93 = vsub.f32 %v77, %v91
    %v94 = vmul.f32 %v92, %v92
    %v95 = vmul.f32 %v93, %v93
    %v96 = vsel %vm75, 1, 0
    %vm97 = vcmp.eq.s32.totalorder %v96, 1
    %v98 = vsel %vm97, %v94, 0.0
    %v99 = vsel %vm97, %v95, 0.0
    %vm100 = vcmp.gt.f32.partialorder %v76, 0.4
    %vm101 = vcmp.gt.f32.partialorder %v77, 0.4
    %vm102 = vmand %vm97, %vm100
    %vm103 = vmand %vm97, %vm101
    %v104 = vsel %vm102, 1, 0
    %v105 = vsel %vm103, 1, 0
    %v106 = vcvt.s32.f32 %v104
    %v107 = vcvt.s32.f32 %v105
    %vm108 = vcmask 1041408
    %v109 = vsel %vm108, %v98, 0.0
    %v110 = vsel %vm108, %v99, 0.0
    %v111 = vadd.f32 %v109, %v110
    %v112 = vld [vmem:[#allocation7] sm:$0x1]
    %v113 = vsel %vm108, %v111, 0.0
    %v114 = vrot.slane %v113, 4
    %v115 = vadd.f32 %v113, %v114
    %v116 = vrot.slane %v115, 2
    %v117 = vadd.f32 %v115, %v116
    %v118 = vrot.slane %v117, 1
    %v119 = vadd.f32 %v117, %v118
    %v120 = vadd.f32 %v112, %v119
    %121 = vst [vmem:[#allocation7] sm:$0x1] %v120
    %s122 = scalar_lea.vmem [#allocation5], 2
    %v123 = vld [vmem:[%s122] sm:$0x3]
    %v124 = vld [vmem:[%s122 + $0xe] sm:$0x3]
    %s125 = scalar_lea.vmem [#allocation2], 2
    %v126 = vld [vmem:[%s125] sm:$0x3]
    %v127 = vld [vmem:[%s125 + $0xe] sm:$0x3]
    %v128 = vsub.f32 %v123, %v126
    %v129 = vsub.f32 %v124, %v127
    %s130 = scalar_lea.vmem [#allocation5], 4
    %v131 = vld [vmem:[%s130] sm:$0x3]
    %v132 = vld [vmem:[%s130 + $0xe] sm:$0x3]
    %s133 = scalar_lea.vmem [#allocation2], 4
    %v134 = vld [vmem:[%s133] sm:$0x3]
    %v135 = vld [vmem:[%s133 + $0xe] sm:$0x3]
    %v136 = vsub.f32 %v131, %v134
    %v137 = vsub.f32 %v132, %v135
    %v138 = vmul.f32 %v128, %v128
    %v139 = vmul.f32 %v129, %v129
    %v140 = vmul.f32 %v136, %v136
    %v141 = vmul.f32 %v137, %v137
    %v142 = vadd.f32 %v138, %v140
    %v143 = vadd.f32 %v139, %v141
    %v144 = vrsqrt.pop %v142
    %v145 = vmul.f32 %v142, %v144
    %vm146 = vcmp.eq.f32.partialorder %v142, inf
    %v147 = vsel %vm146, %v142, %v145
    %vm148 = vcmp.eq.f32.partialorder %v142, 0.0
    %v149 = vand.u32 %v142, 2147483648
    %v150 = vsel %vm148, %v149, %v147
    %v151 = vrsqrt.pop %v143
    %v152 = vmul.f32 %v143, %v151
    %vm153 = vcmp.eq.f32.partialorder %v143, inf
    %v154 = vsel %vm153, %v143, %v152
    %vm155 = vcmp.eq.f32.partialorder %v143, 0.0
    %v156 = vand.u32 %v143, 2147483648
    %v157 = vsel %vm155, %v156, %v154
    %v158 = vmul.f32 %v76, %v150
    %v159 = vmul.f32 %v77, %v157
    %v160 = vsel %vm102, %v158, 0.0
    %v161 = vsel %vm103, %v159, 0.0
    %v162 = vsel %vm108, %v160, 0.0
    %v163 = vsel %vm108, %v161, 0.0
    %v164 = vadd.f32 %v162, %v163
    %v165 = vld [vmem:[#allocation7 + $0x8] sm:$0x1]
    %v166 = vsel %vm108, %v164, 0.0
    %v167 = vrot.slane %v166, 4
    %v168 = vadd.f32 %v166, %v167
    %v169 = vrot.slane %v168, 2
    %v170 = vadd.f32 %v168, %v169
    %v171 = vrot.slane %v170, 1
    %v172 = vadd.f32 %v170, %v171
    %v173 = vadd.f32 %v165, %v172
    %174 = vst [vmem:[#allocation7 + $0x8] sm:$0x1] %v173
    %s175 = scalar_lea.vmem [#allocation5], 6
    %v176 = vld [vmem:[%s175] sm:$0x3]
    %v177 = vld [vmem:[%s175 + $0xe] sm:$0x3]
    %s178 = scalar_lea.vmem [#allocation2], 6
    %v179 = vld [vmem:[%s178] sm:$0x3]
    %v180 = vld [vmem:[%s178 + $0xe] sm:$0x3]
    %v181 = vsub.f32 %v176, %v179
    %v182 = vsub.f32 %v177, %v180
    %s183 = scalar_lea.vmem [#allocation5], 8
    %v184 = vld [vmem:[%s183] sm:$0x3]
    %v185 = vld [vmem:[%s183 + $0xe] sm:$0x3]
    %s186 = scalar_lea.vmem [#allocation2], 8
    %v187 = vld [vmem:[%s186] sm:$0x3]
    %v188 = vld [vmem:[%s186 + $0xe] sm:$0x3]
    %v189 = vsub.f32 %v184, %v187
    %v190 = vsub.f32 %v185, %v188
    %v191 = vmul.f32 %v181, %v181
    %v192 = vmul.f32 %v182, %v182
    %v193 = vmul.f32 %v189, %v189
    %v194 = vmul.f32 %v190, %v190
    %v195 = vadd.f32 %v191, %v193
    %v196 = vadd.f32 %v192, %v194
    %v197 = vrsqrt.pop %v195
    %v198 = vmul.f32 %v195, %v197
    %vm199 = vcmp.eq.f32.partialorder %v195, inf
    %v200 = vsel %vm199, %v195, %v198
    %vm201 = vcmp.eq.f32.partialorder %v195, 0.0
    %v202 = vand.u32 %v195, 2147483648
    %v203 = vsel %vm201, %v202, %v200
    %v204 = vrsqrt.pop %v196
    %v205 = vmul.f32 %v196, %v204
    %vm206 = vcmp.eq.f32.partialorder %v196, inf
    %v207 = vsel %vm206, %v196, %v205
    %vm208 = vcmp.eq.f32.partialorder %v196, 0.0
    %v209 = vand.u32 %v196, 2147483648
    %v210 = vsel %vm208, %v209, %v207
    %v211 = vmul.f32 %v76, %v203
    %v212 = vmul.f32 %v77, %v210
    %v213 = vsel %vm102, %v211, 0.0
    %v214 = vsel %vm103, %v212, 0.0
    %v215 = vsel %vm108, %v213, 0.0
    %v216 = vsel %vm108, %v214, 0.0
    %v217 = vadd.f32 %v215, %v216
    %v218 = vld [vmem:[#allocation7 + $0x10] sm:$0x1]
    %v219 = vsel %vm108, %v217, 0.0
    %v220 = vrot.slane %v219, 4
    %v221 = vadd.f32 %v219, %v220
    %v222 = vrot.slane %v221, 2
    %v223 = vadd.f32 %v221, %v222
    %v224 = vrot.slane %v223, 1
    %v225 = vadd.f32 %v223, %v224
    %v226 = vadd.f32 %v218, %v225
    %227 = vst [vmem:[#allocation7 + $0x10] sm:$0x1] %v226
    %s228 = scalar_lea.vmem [#allocation5], 10
    %v229 = vld [vmem:[%s228] sm:$0x3]
    %v230 = vld [vmem:[%s228 + $0xe] sm:$0x3]
    %s231 = scalar_lea.vmem [#allocation2], 10
    %v232 = vld [vmem:[%s231] sm:$0x3]
    %v233 = vld [vmem:[%s231 + $0xe] sm:$0x3]
    %v234 = vsub.f32 %v229, %v232
    %v235 = vsub.f32 %v230, %v233
    %s236 = scalar_lea.vmem [#allocation5], 12
    %v237 = vld [vmem:[%s236] sm:$0x3]
    %v238 = vld [vmem:[%s236 + $0xe] sm:$0x3]
    %s239 = scalar_lea.vmem [#allocation2], 12
    %v240 = vld [vmem:[%s239] sm:$0x3]
    %v241 = vld [vmem:[%s239 + $0xe] sm:$0x3]
    %v242 = vsub.f32 %v237, %v240
    %v243 = vsub.f32 %v238, %v241
    %v244 = vmul.f32 %v234, %v234
    %v245 = vmul.f32 %v235, %v235
    %v246 = vmul.f32 %v242, %v242
    %v247 = vmul.f32 %v243, %v243
    %v248 = vadd.f32 %v244, %v246
    %v249 = vadd.f32 %v245, %v247
    %v250 = vrsqrt.pop %v248
    %v251 = vmul.f32 %v248, %v250
    %vm252 = vcmp.eq.f32.partialorder %v248, inf
    %v253 = vsel %vm252, %v248, %v251
    %vm254 = vcmp.eq.f32.partialorder %v248, 0.0
    %v255 = vand.u32 %v248, 2147483648
    %v256 = vsel %vm254, %v255, %v253
    %v257 = vrsqrt.pop %v249
    %v258 = vmul.f32 %v249, %v257
    %vm259 = vcmp.eq.f32.partialorder %v249, inf
    %v260 = vsel %vm259, %v249, %v258
    %vm261 = vcmp.eq.f32.partialorder %v249, 0.0
    %v262 = vand.u32 %v249, 2147483648
    %v263 = vsel %vm261, %v262, %v260
    %v264 = vmul.f32 %v76, %v256
    %v265 = vmul.f32 %v77, %v263
    %v266 = vsel %vm102, %v264, 0.0
    %v267 = vsel %vm103, %v265, 0.0
    %v268 = vsel %vm108, %v266, 0.0
    %v269 = vsel %vm108, %v267, 0.0
    %v270 = vadd.f32 %v268, %v269
    %v271 = vld [vmem:[#allocation7 + $0x18] sm:$0x1]
    %v272 = vsel %vm108, %v270, 0.0
    %v273 = vrot.slane %v272, 4
    %v274 = vadd.f32 %v272, %v273
    %v275 = vrot.slane %v274, 2
    %v276 = vadd.f32 %v274, %v275
    %v277 = vrot.slane %v276, 1
    %v278 = vadd.f32 %v276, %v277
    %v279 = vadd.f32 %v271, %v278
    %280 = vst [vmem:[#allocation7 + $0x18] sm:$0x1] %v279
    %v281 = vsel %vm108, %v106, 0.0
    %v282 = vsel %vm108, %v107, 0.0
    %v283 = vadd.f32 %v281, %v282
    %v284 = vld [vmem:[#allocation7 + $0x20] sm:$0x1]
    %v285 = vsel %vm108, %v283, 0.0
    %v286 = vrot.slane %v285, 4
    %v287 = vadd.f32 %v285, %v286
    %v288 = vrot.slane %v287, 2
    %v289 = vadd.f32 %v287, %v288
    %v290 = vrot.slane %v289, 1
    %v291 = vadd.f32 %v289, %v290
    %v292 = vadd.f32 %v284, %v291
    %293 = vst [vmem:[#allocation7 + $0x20] sm:$0x1] %v292
    // Predicated region
    $region22: #{tpu_custom_call.1} parent=1 // pred_check
      _
    $region23: #{tpu_custom_call.1} parent=1 // pred_check_branch
      %295 = sbr.rel (0) target = $region25
    $region24: #{tpu_custom_call.1} parent=1 // pred_region
      %s297 = ssub.s32 640, 640
      %298 = vsyncadd [#allocation4], %s297
      %s299 = sshll.u32 [#allocation7], 4
      %s300 = int_to_ptr.vmem [resolvable:$true] %s299
      %305 = dma.vmem_to_hbm [thread:$0]  %s300, 640, %s2, [#allocation4], 128, 128, 8
    $region25: #{tpu_custom_call.1} parent=1 // pred_fallthru
      _
    // Predicated region
    $region26: #{tpu_custom_call.1} parent=1 // pred_check
      _
    $region27: #{tpu_custom_call.1} parent=1 // pred_check_branch
      %307 = sbr.rel (0) target = $region29
    $region28: #{tpu_custom_call.1} parent=1 // pred_region
      %308 = dma.done [#allocation4], 640
    $region29: #{tpu_custom_call.1} parent=1 // pred_fallthru
      _
    %309 = vsyncpa [#allocation3], 1
    %310 = vsyncpa [#allocation6], 1
    %311 = vsyncpa [#allocation4], 1

</llo_original>
